<compile_context>
chip_gen: v7x
topology: tpu7x:2x2x1
jax: 0.10.0
libtpu: 0.0.40
codegen_flags: <defaults>
</compile_context>

<pallas_src>
import jax
import jax.numpy as jnp
from jax.experimental import pallas as pl
from jax.experimental.pallas import tpu as pltpu


def ff_kernel(x_ref, w1_ref, b1_ref, w2_ref, b2_ref, w3_ref, b3_ref, o_ref):
    x = x_ref[...]  # bf16 (block_b, n_dim)
    # layer 1: Linear(n_dim, 32) + ReLU   (bf16 x bf16 -> f32 accumulate on MXU)
    h1 = jnp.dot(x, w1_ref[...], preferred_element_type=jnp.float32) + b1_ref[...]
    h1 = jnp.maximum(h1, 0.0)                       # f32 VPU math
    # layer 2: Linear(32, 16) + ReLU
    h2 = jnp.dot(h1.astype(jnp.bfloat16), w2_ref[...],
                 preferred_element_type=jnp.float32) + b2_ref[...]
    h2 = jnp.maximum(h2, 0.0)
    # layer 3: Linear(16, n_classes) + Sigmoid
    logits = jnp.dot(h2.astype(jnp.bfloat16), w3_ref[...],
                     preferred_element_type=jnp.float32) + b3_ref[...]
    o_ref[...] = jax.nn.sigmoid(logits).astype(o_ref.dtype)


def _default_block_b(B):
    # Big tiles amortize the ~0.35us/step overhead and keep the x DMA streaming;
    # cap at ceil(B/2) (rounded up to the 8-row f32 sublane) once B >= 16 so the
    # grid has >= 2 steps (double-buffer overlap + v7x megacore sharding).
    bb = min(B, 1024)
    if B >= 16:
        half = -(-B // 2)            # ceil(B/2)
        half = -(-half // 8) * 8     # round up to multiple of 8
        bb = min(bb, half)
    return max(bb, 1)


def feedforward(x, params, *, block_b=None):
    """x: (B, n_dim) float32. params: dict of w1,b1,w2,b2,w3,b3 (w's already (in,out))."""
    B, n_dim = x.shape
    # Cast the streamed operand and weights to bf16 (halves HBM bytes); biases stay f32.
    xb = x.astype(jnp.bfloat16)
    w1 = params["w1"].astype(jnp.bfloat16)
    w2 = params["w2"].astype(jnp.bfloat16)
    w3 = params["w3"].astype(jnp.bfloat16)
    b1, b2, b3 = params["b1"], params["b2"], params["b3"]
    n_classes = w3.shape[1]

    if block_b is None:
        block_b = _default_block_b(B)
    grid = (pl.cdiv(B, block_b),)

    # Weights/biases: full-array blocks with a constant index_map -> resident in VMEM
    # across grid steps (no per-step re-DMA).
    full = lambda a: pl.BlockSpec(a.shape, lambda i: (0,) * a.ndim)

    flops = 2 * B * (n_dim * 32 + 32 * 16 + 16 * n_classes)
    bytes_accessed = (
        B * n_dim * 2                                   # x (bf16)
        + B * n_classes * 4                             # output (f32)
        + (n_dim * 32 + 32 * 16 + 16 * n_classes) * 2   # weights (bf16)
        + (32 + 16 + n_classes) * 4                     # biases (f32)
    )

    return pl.pallas_call(
        ff_kernel,
        out_shape=jax.ShapeDtypeStruct((B, n_classes), jnp.float32),
        grid_spec=pl.GridSpec(
            grid=grid,
            in_specs=[
                pl.BlockSpec((block_b, n_dim), lambda i: (i, 0)),  # streamed x tile
                full(w1), full(b1),
                full(w2), full(b2),
                full(w3), full(b3),
            ],
            out_specs=pl.BlockSpec((block_b, n_classes), lambda i: (i, 0)),
        ),
        compiler_params=pltpu.CompilerParams(
            dimension_semantics=("parallel",),   # batch axis shards across v7x TCs
        ),
        cost_estimate=pl.CostEstimate(
            flops=flops,
            transcendentals=B * n_classes,       # sigmoid exp
            bytes_accessed=bytes_accessed,
        ),
    )(xb, w1, b1, w2, b2, w3, b3)


def init_params(key, n_dim, n_classes):
    """Deterministic init mimicking nn.Linear shapes (weights stored transposed as (in,out))."""
    ks = jax.random.split(key, 6)

    def linear(kw, kb, fan_in, fan_out):
        bound = 1.0 / jnp.sqrt(fan_in)
        w = jax.random.uniform(kw, (fan_in, fan_out), jnp.float32, -bound, bound)
        b = jax.random.uniform(kb, (1, fan_out), jnp.float32, -bound, bound)
        return w, b

    w1, b1 = linear(ks[0], ks[1], n_dim, 32)
    w2, b2 = linear(ks[2], ks[3], 32, 16)
    w3, b3 = linear(ks[4], ks[5], 16, n_classes)
    return {"w1": w1, "b1": b1, "w2": w2, "b2": b2, "w3": w3, "b3": b3}


def feedforward_ref(x, p):
    """Pure-JAX reference mirroring the kernel's bf16 operand casts (f32 accumulation)."""
    bf = lambda a: a.astype(jnp.bfloat16).astype(jnp.float32)
    h1 = jnp.maximum(bf(x) @ bf(p["w1"]) + p["b1"], 0.0)
    h2 = jnp.maximum(bf(h1) @ bf(p["w2"]) + p["b2"], 0.0)
    return jax.nn.sigmoid(bf(h2) @ bf(p["w3"]) + p["b3"])


def feedforward_ref_f32(x, p):
    """Full-f32 reference (original module semantics) for a looser sanity check."""
    h1 = jnp.maximum(x @ p["w1"] + p["b1"], 0.0)
    h2 = jnp.maximum(h1 @ p["w2"] + p["b2"], 0.0)
    return jax.nn.sigmoid(h2 @ p["w3"] + p["b3"])


if __name__ == "__main__":
    key = jax.random.PRNGKey(0)
    n_dim, n_classes = 32, 4
    kx, kp = jax.random.split(key)
    params = init_params(kp, n_dim, n_classes)

    # Multiple batch sizes: tiny (1 grid step), multi-step (megacore-friendly), ragged.
    for batch in (8, 256, 100):
        x = jax.random.normal(jax.random.fold_in(kx, batch), (batch, n_dim), jnp.float32)

        out = feedforward(x, params)
        out = jax.block_until_ready(out)

        ref = feedforward_ref(x, params)
        ref_f32 = feedforward_ref_f32(x, params)

        assert out.shape == (batch, n_classes)
        assert jnp.allclose(out, ref, atol=1e-3, rtol=1e-3), "mismatch vs bf16-mirrored ref"
        assert jnp.allclose(out, ref_f32, atol=3e-2, rtol=3e-2), "mismatch vs f32 ref"

    print("KERNEL_OK")
</pallas_src>

<mosaic_0001>
module attributes {stable_mosaic.version = 11 : i64} {
  func.func @ff_kernel(%arg0: i32, %arg1: memref<8x32xbf16, #tpu.memory_space<vmem>>, %arg2: memref<32x32xbf16, #tpu.memory_space<vmem>>, %arg3: memref<1x32xf32, #tpu.memory_space<vmem>>, %arg4: memref<32x16xbf16, #tpu.memory_space<vmem>>, %arg5: memref<1x16xf32, #tpu.memory_space<vmem>>, %arg6: memref<16x4xbf16, #tpu.memory_space<vmem>>, %arg7: memref<1x4xf32, #tpu.memory_space<vmem>>, %arg8: memref<8x4xf32, #tpu.memory_space<vmem>>) attributes {dimension_semantics = [#tpu.dimension_semantics<parallel>], iteration_bounds = array<i64: 1>, scalar_prefetch = 0 : i64, scratch_operands = 0 : i64, tpu.core_type = #tpu.core_type<tc>, window_params = [{transform_indices = @transform_0, window_bounds = array<i64: 8, 32>}, {pipeline_mode = #tpu.pipeline_mode<synchronous>, transform_indices = @transform_1, window_bounds = array<i64: 32, 32>}, {pipeline_mode = #tpu.pipeline_mode<synchronous>, transform_indices = @transform_2, window_bounds = array<i64: 1, 32>}, {pipeline_mode = #tpu.pipeline_mode<synchronous>, transform_indices = @transform_3, window_bounds = array<i64: 32, 16>}, {pipeline_mode = #tpu.pipeline_mode<synchronous>, transform_indices = @transform_4, window_bounds = array<i64: 1, 16>}, {pipeline_mode = #tpu.pipeline_mode<synchronous>, transform_indices = @transform_5, window_bounds = array<i64: 16, 4>}, {pipeline_mode = #tpu.pipeline_mode<synchronous>, transform_indices = @transform_6, window_bounds = array<i64: 1, 4>}, {transform_indices = @transform_7, window_bounds = array<i64: 8, 4>}]} {
    %c0 = arith.constant 0 : index
    %c0_0 = arith.constant 0 : index
    %0 = vector.load %arg1[%c0, %c0_0] : memref<8x32xbf16, #tpu.memory_space<vmem>>, vector<8x32xbf16>
    %c0_1 = arith.constant 0 : index
    %c0_2 = arith.constant 0 : index
    %1 = vector.load %arg2[%c0_1, %c0_2] : memref<32x32xbf16, #tpu.memory_space<vmem>>, vector<32x32xbf16>
    %cst = arith.constant dense<0.000000e+00> : vector<8x32xf32>
    %2 = tpu.matmul %0, %1, %cst {dimension_numbers = #tpu.dot_dimension_numbers<[1], [0], [0], [1], [0, 0, 1, 1], [], []>} : vector<8x32xbf16>, vector<32x32xbf16>, vector<8x32xf32> -> vector<8x32xf32>
    %c0_3 = arith.constant 0 : index
    %c0_4 = arith.constant 0 : index
    %3 = vector.load %arg3[%c0_3, %c0_4] : memref<1x32xf32, #tpu.memory_space<vmem>>, vector<1x32xf32>
    %4 = vector.broadcast %3 : vector<1x32xf32> to vector<8x32xf32>
    %5 = arith.addf %2, %4 : vector<8x32xf32>
    %cst_5 = arith.constant 0.000000e+00 : f32
    %6 = vector.broadcast %cst_5 : f32 to vector<8x32xf32>
    %7 = arith.maximumf %5, %6 : vector<8x32xf32>
    %8 = arith.truncf %7 : vector<8x32xf32> to vector<8x32xbf16>
    %c0_6 = arith.constant 0 : index
    %c0_7 = arith.constant 0 : index
    %9 = vector.load %arg4[%c0_6, %c0_7] : memref<32x16xbf16, #tpu.memory_space<vmem>>, vector<32x16xbf16>
    %cst_8 = arith.constant dense<0.000000e+00> : vector<8x16xf32>
    %10 = tpu.matmul %8, %9, %cst_8 {dimension_numbers = #tpu.dot_dimension_numbers<[1], [0], [0], [1], [0, 0, 1, 1], [], []>} : vector<8x32xbf16>, vector<32x16xbf16>, vector<8x16xf32> -> vector<8x16xf32>
    %c0_9 = arith.constant 0 : index
    %c0_10 = arith.constant 0 : index
    %11 = vector.load %arg5[%c0_9, %c0_10] : memref<1x16xf32, #tpu.memory_space<vmem>>, vector<1x16xf32>
    %12 = vector.broadcast %11 : vector<1x16xf32> to vector<8x16xf32>
    %13 = arith.addf %10, %12 : vector<8x16xf32>
    %cst_11 = arith.constant 0.000000e+00 : f32
    %14 = vector.broadcast %cst_11 : f32 to vector<8x16xf32>
    %15 = arith.maximumf %13, %14 : vector<8x16xf32>
    %16 = arith.truncf %15 : vector<8x16xf32> to vector<8x16xbf16>
    %c0_12 = arith.constant 0 : index
    %c0_13 = arith.constant 0 : index
    %17 = vector.load %arg6[%c0_12, %c0_13] : memref<16x4xbf16, #tpu.memory_space<vmem>>, vector<16x4xbf16>
    %cst_14 = arith.constant dense<0.000000e+00> : vector<8x4xf32>
    %18 = tpu.matmul %16, %17, %cst_14 {dimension_numbers = #tpu.dot_dimension_numbers<[1], [0], [0], [1], [0, 0, 1, 1], [], []>} : vector<8x16xbf16>, vector<16x4xbf16>, vector<8x4xf32> -> vector<8x4xf32>
    %c0_15 = arith.constant 0 : index
    %c0_16 = arith.constant 0 : index
    %19 = vector.load %arg7[%c0_15, %c0_16] : memref<1x4xf32, #tpu.memory_space<vmem>>, vector<1x4xf32>
    %20 = vector.broadcast %19 : vector<1x4xf32> to vector<8x4xf32>
    %21 = arith.addf %18, %20 : vector<8x4xf32>
    %22 = arith.negf %21 : vector<8x4xf32>
    %23 = math.exp %22 : vector<8x4xf32>
    %cst_17 = arith.constant 1.000000e+00 : f32
    %24 = vector.broadcast %cst_17 : f32 to vector<8x4xf32>
    %25 = arith.addf %24, %23 : vector<8x4xf32>
    %26 = arith.divf %24, %25 : vector<8x4xf32>
    %c0_18 = arith.constant 0 : index
    %c0_19 = arith.constant 0 : index
    %27 = vector.load %arg8[%c0_18, %c0_19] : memref<8x4xf32, #tpu.memory_space<vmem>>, vector<8x4xf32>
    tpu.vector_store %arg8[%c0_18, %c0_19], %26 {strides = array<i32>} : memref<8x4xf32, #tpu.memory_space<vmem>>, vector<8x4xf32>,
    return
  }
  func.func @transform_0(%arg0: i32) -> (i32, i32) {
    %c0_i32 = arith.constant 0 : i32
    %c0_i32_0 = arith.constant 0 : i32
    return %arg0, %c0_i32 : i32, i32
  }
  func.func @transform_1(%arg0: i32) -> (i32, i32) {
    %c0_i32 = arith.constant 0 : i32
    %c0_i32_0 = arith.constant 0 : i32
    %c0_i32_1 = arith.constant 0 : i32
    return %c0_i32, %c0_i32_0 : i32, i32
  }
  func.func @transform_2(%arg0: i32) -> (i32, i32) {
    %c0_i32 = arith.constant 0 : i32
    %c0_i32_0 = arith.constant 0 : i32
    %c0_i32_1 = arith.constant 0 : i32
    return %c0_i32, %c0_i32_0 : i32, i32
  }
  func.func @transform_3(%arg0: i32) -> (i32, i32) {
    %c0_i32 = arith.constant 0 : i32
    %c0_i32_0 = arith.constant 0 : i32
    %c0_i32_1 = arith.constant 0 : i32
    return %c0_i32, %c0_i32_0 : i32, i32
  }
  func.func @transform_4(%arg0: i32) -> (i32, i32) {
    %c0_i32 = arith.constant 0 : i32
    %c0_i32_0 = arith.constant 0 : i32
    %c0_i32_1 = arith.constant 0 : i32
    return %c0_i32, %c0_i32_0 : i32, i32
  }
  func.func @transform_5(%arg0: i32) -> (i32, i32) {
    %c0_i32 = arith.constant 0 : i32
    %c0_i32_0 = arith.constant 0 : i32
    %c0_i32_1 = arith.constant 0 : i32
    return %c0_i32, %c0_i32_0 : i32, i32
  }
  func.func @transform_6(%arg0: i32) -> (i32, i32) {
    %c0_i32 = arith.constant 0 : i32
    %c0_i32_0 = arith.constant 0 : i32
    %c0_i32_1 = arith.constant 0 : i32
    return %c0_i32, %c0_i32_0 : i32, i32
  }
  func.func @transform_7(%arg0: i32) -> (i32, i32) {
    %c0_i32 = arith.constant 0 : i32
    %c0_i32_0 = arith.constant 0 : i32
    return %arg0, %c0_i32 : i32, i32
  }
}

</mosaic_0001>

<llo_original>
// kernel: tpu_custom_call.1
$region0: #{tpu_custom_call.1}
  #allocation0 [shape = 'u32[]', space=smem, size = 0x4, offset = 0x4, fixed_abs, tag = 'smem constant byte address 0x4 - core index']
  #allocation1 [shape = 'u32[144,128]{1,0:T(1,128)}', space=vmem, size = 0x12000, scoped, tag = 'internal scratch']
  %s0 = inlined_call_operand.vmem [shape: bf16[8,32], index: 0, kind: input, shape index: {}]
  %s1 = inlined_call_operand.vmem [shape: bf16[32,32], index: 1, kind: input, shape index: {}]
  %s2 = inlined_call_operand.vmem [shape: f32[1,32], index: 2, kind: input, shape index: {}]
  %s3 = inlined_call_operand.vmem [shape: bf16[32,16], index: 3, kind: input, shape index: {}]
  %s4 = inlined_call_operand.vmem [shape: f32[1,16], index: 4, kind: input, shape index: {}]
  %s5 = inlined_call_operand.vmem [shape: bf16[16,4], index: 5, kind: input, shape index: {}]
  %s6 = inlined_call_operand.vmem [shape: f32[1,4], index: 6, kind: input, shape index: {}]
  %s7 = inlined_call_operand.vmem [shape: f32[8,4], index: 7, kind: output, shape index: {}]
  %s8 = sld [smem:[#allocation0]]
  $region38: #{tpu_custom_call.1} parent=0
    _
  %s10 = ssub.s32 1, %s8
  %s11 = scalar_select 0, %s10, %s8
  // Predicated region
  $region2: #{tpu_custom_call.1} parent=0 // pred_check
    _
  $region3: #{tpu_custom_call.1} parent=0 // pred_check_branch
    %13 = sbr.rel (0) target = $region5
  $region4: #{tpu_custom_call.1} parent=0 // pred_region
    _
  $region5: #{tpu_custom_call.1} parent=0 // pred_fallthru
    _
  // Predicated region
  $region6: #{tpu_custom_call.1} parent=0 // pred_check
    _
  $region7: #{tpu_custom_call.1} parent=0 // pred_check_branch
    %15 = sbr.rel (0) target = $region9
  $region8: #{tpu_custom_call.1} parent=0 // pred_region
    _
  $region9: #{tpu_custom_call.1} parent=0 // pred_fallthru
    _
  // Predicated region
  $region10: #{tpu_custom_call.1} parent=0 // pred_check
    _
  $region11: #{tpu_custom_call.1} parent=0 // pred_check_branch
    %17 = sbr.rel (0) target = $region13
  $region12: #{tpu_custom_call.1} parent=0 // pred_region
    _
  $region13: #{tpu_custom_call.1} parent=0 // pred_fallthru
    _
  // Predicated region
  $region14: #{tpu_custom_call.1} parent=0 // pred_check
    _
  $region15: #{tpu_custom_call.1} parent=0 // pred_check_branch
    %19 = sbr.rel (0) target = $region17
  $region16: #{tpu_custom_call.1} parent=0 // pred_region
    _
  $region17: #{tpu_custom_call.1} parent=0 // pred_fallthru
    _
  // Predicated region
  $region18: #{tpu_custom_call.1} parent=0 // pred_check
    _
  $region19: #{tpu_custom_call.1} parent=0 // pred_check_branch
    %21 = sbr.rel (0) target = $region21
  $region20: #{tpu_custom_call.1} parent=0 // pred_region
    _
  $region21: #{tpu_custom_call.1} parent=0 // pred_fallthru
    _
  // Predicated region
  $region22: #{tpu_custom_call.1} parent=0 // pred_check
    _
  $region23: #{tpu_custom_call.1} parent=0 // pred_check_branch
    %23 = sbr.rel (0) target = $region25
  $region24: #{tpu_custom_call.1} parent=0 // pred_region
    _
  $region25: #{tpu_custom_call.1} parent=0 // pred_fallthru
    _
  // Predicated region
  $region26: #{tpu_custom_call.1} parent=0 // pred_check
    _
  $region27: #{tpu_custom_call.1} parent=0 // pred_check_branch
    %25 = sbr.rel (0) target = $region29
  $region28: #{tpu_custom_call.1} parent=0 // pred_region
    _
  $region29: #{tpu_custom_call.1} parent=0 // pred_fallthru
    _
  %v27 = vld [vmem:[%s0] sm:$0xf]
  %v28 = vld [vmem:[%s1] sm:$0xf]
  %v29 = vld [vmem:[%s1 + $0x4] sm:$0xf]
  %v30 = vld [vmem:[%s1 + $0x8] sm:$0xf]
  %v31 = vld [vmem:[%s1 + $0xc] sm:$0xf]
  %v32 = vld [vmem:[%s2] sm:$0x1]
  %v34 = vlaneseq
  %v35 = vshrl.u32 %v34, 7
  %v36 = vsub.s32 0, %v35
  %v37 = vrot.slane %v32, %v36
  %v43 = vunpack.c.l.b16 %v28
  %v44 = vunpack.c.l.b16 %v29
  %v45 = vunpack.c.l.b16 %v30
  %v46 = vunpack.c.l.b16 %v31
  %v47 = vpack.c.b16 %v44, %v43
  %v48 = vpack.c.b16 %v46, %v45
  %vm51 = vcmask 261120
  %v53 = vsel %vm51, %v27, 0
  %55 = vmatprep.subr.bf16.mxu0 0
  %56 = vmatpush1.bf16.msra.mxu0 %v47
  %57 = vmatprep.subr.bf16.mxu0 0
  %58 = vmatpush1.bf16.msra.mxu0 %v48
  %59 = vmatprep.subr.bf16.mxu0 0
  %60 = vmatpush1.bf16.msra.mxu0 0
  %61 = vmatprep.subr.bf16.mxu0 0
  %62 = vmatpush1.bf16.msra.mxu0 0
  %63 = vmatprep.subr.bf16.mxu0 0
  %64 = vmatpush1.bf16.msra.mxu0 0
  %65 = vmatprep.subr.bf16.mxu0 0
  %66 = vmatpush1.bf16.msra.mxu0 0
  %67 = vmatprep.subr.bf16.mxu0 0
  %68 = vmatpush1.bf16.msra.mxu0 0
  %69 = vmatprep.subr.bf16.mxu0 0
  %70 = vmatpush1.bf16.msra.mxu0 0
  %71 = vmatprep.subr.bf16.mxu0 0
  %72 = vmatpush1.bf16.msra.mxu0 0
  %73 = vmatprep.subr.bf16.mxu0 0
  %74 = vmatpush1.bf16.msra.mxu0 0
  %75 = vmatprep.subr.bf16.mxu0 0
  %76 = vmatpush1.bf16.msra.mxu0 0
  %77 = vmatprep.subr.bf16.mxu0 0
  %78 = vmatpush1.bf16.msra.mxu0 0
  %79 = vmatprep.subr.bf16.mxu0 0
  %80 = vmatpush1.bf16.msra.mxu0 0
  %81 = vmatprep.subr.bf16.mxu0 0
  %82 = vmatpush1.bf16.msra.mxu0 0
  %83 = vmatprep.subr.bf16.mxu0 0
  %84 = vmatpush1.bf16.msra.mxu0 0
  %85 = vmatprep.subr.bf16.mxu0 0
  %86 = vmatpush1.bf16.msra.mxu0 0
  %87 = vmatprep.mubr.bf16.mxu0 0
  %88 = vmatmul.mubr.bf16.gmra.mrb[0].mxu0 %v53
  %v89 = vpop.f32.mrb[0].mxu0
  %v90 = vadd.f32 %v37, %v89
  %v91 = vpop.f32.mrb[0].mxu0
  %v92 = vpop.f32.mrb[0].mxu0
  %v93 = vpop.f32.mrb[0].mxu0
  %94 = vdwg.mxu0
  %v95 = vmax.f32 %v90, 0.0
  %v96 = vpack.c.bf16 %v95, %v95
  %v97 = vld [vmem:[%s3] sm:$0xf]
  %v98 = vld [vmem:[%s3 + $0x4] sm:$0xf]
  %v99 = vld [vmem:[%s3 + $0x8] sm:$0xf]
  %v100 = vld [vmem:[%s3 + $0xc] sm:$0xf]
  %v101 = vld [vmem:[%s4] sm:$0x1]
  %v103 = vlaneseq
  %v104 = vshrl.u32 %v103, 7
  %v105 = vsub.s32 0, %v104
  %v106 = vrot.slane %v101, %v105
  %v112 = vunpack.c.l.b16 %v97
  %v113 = vunpack.c.l.b16 %v98
  %v114 = vunpack.c.l.b16 %v99
  %v115 = vunpack.c.l.b16 %v100
  %v116 = vpack.c.b16 %v113, %v112
  %v117 = vpack.c.b16 %v115, %v114
  %v121 = vsel %vm51, %v96, 0
  %123 = vmatprep.subr.bf16.mxu0 0
  %124 = vmatpush1.bf16.msra.mxu0 %v116
  %125 = vmatprep.subr.bf16.mxu0 0
  %126 = vmatpush1.bf16.msra.mxu0 %v117
  %127 = vmatprep.subr.bf16.mxu0 0
  %128 = vmatpush1.bf16.msra.mxu0 0
  %129 = vmatprep.subr.bf16.mxu0 0
  %130 = vmatpush1.bf16.msra.mxu0 0
  %131 = vmatprep.subr.bf16.mxu0 0
  %132 = vmatpush1.bf16.msra.mxu0 0
  %133 = vmatprep.subr.bf16.mxu0 0
  %134 = vmatpush1.bf16.msra.mxu0 0
  %135 = vmatprep.subr.bf16.mxu0 0
  %136 = vmatpush1.bf16.msra.mxu0 0
  %137 = vmatprep.subr.bf16.mxu0 0
  %138 = vmatpush1.bf16.msra.mxu0 0
  %139 = vmatprep.subr.bf16.mxu0 0
  %140 = vmatpush1.bf16.msra.mxu0 0
  %141 = vmatprep.subr.bf16.mxu0 0
  %142 = vmatpush1.bf16.msra.mxu0 0
  %143 = vmatprep.subr.bf16.mxu0 0
  %144 = vmatpush1.bf16.msra.mxu0 0
  %145 = vmatprep.subr.bf16.mxu0 0
  %146 = vmatpush1.bf16.msra.mxu0 0
  %147 = vmatprep.subr.bf16.mxu0 0
  %148 = vmatpush1.bf16.msra.mxu0 0
  %149 = vmatprep.subr.bf16.mxu0 0
  %150 = vmatpush1.bf16.msra.mxu0 0
  %151 = vmatprep.subr.bf16.mxu0 0
  %152 = vmatpush1.bf16.msra.mxu0 0
  %153 = vmatprep.subr.bf16.mxu0 0
  %154 = vmatpush1.bf16.msra.mxu0 0
  %155 = vmatprep.mubr.bf16.mxu0 0
  %156 = vmatmul.mubr.bf16.gmra.mrb[0].mxu0 %v121
  %v157 = vpop.f32.mrb[0].mxu0
  %v158 = vadd.f32 %v106, %v157
  %v159 = vpop.f32.mrb[0].mxu0
  %v160 = vpop.f32.mrb[0].mxu0
  %v161 = vpop.f32.mrb[0].mxu0
  %162 = vdwg.mxu0
  %v163 = vmax.f32 %v158, 0.0
  %v164 = vpack.c.bf16 %v163, %v163
  %v165 = vld [vmem:[%s5] sm:$0xf]
  %v166 = vld [vmem:[%s5 + $0x4] sm:$0xf]
  %v167 = vld [vmem:[%s6] sm:$0x1]
  %v169 = vlaneseq
  %v170 = vshrl.u32 %v169, 7
  %v171 = vsub.s32 0, %v170
  %v172 = vrot.slane %v167, %v171
  %v176 = vunpack.c.l.b16 %v165
  %v177 = vunpack.c.l.b16 %v166
  %v178 = vpack.c.b16 %v177, %v176
  %vm180 = vcmask 130048
  %v182 = vsel %vm180, %v164, 0
  %184 = vmatprep.subr.bf16.mxu0 0
  %185 = vmatpush1.bf16.msra.mxu0 %v178
  %186 = vmatprep.subr.bf16.mxu0 0
  %187 = vmatpush1.bf16.msra.mxu0 0
  %188 = vmatprep.subr.bf16.mxu0 0
  %189 = vmatpush1.bf16.msra.mxu0 0
  %190 = vmatprep.subr.bf16.mxu0 0
  %191 = vmatpush1.bf16.msra.mxu0 0
  %192 = vmatprep.subr.bf16.mxu0 0
  %193 = vmatpush1.bf16.msra.mxu0 0
  %194 = vmatprep.subr.bf16.mxu0 0
  %195 = vmatpush1.bf16.msra.mxu0 0
  %196 = vmatprep.subr.bf16.mxu0 0
  %197 = vmatpush1.bf16.msra.mxu0 0
  %198 = vmatprep.subr.bf16.mxu0 0
  %199 = vmatpush1.bf16.msra.mxu0 0
  %200 = vmatprep.subr.bf16.mxu0 0
  %201 = vmatpush1.bf16.msra.mxu0 0
  %202 = vmatprep.subr.bf16.mxu0 0
  %203 = vmatpush1.bf16.msra.mxu0 0
  %204 = vmatprep.subr.bf16.mxu0 0
  %205 = vmatpush1.bf16.msra.mxu0 0
  %206 = vmatprep.subr.bf16.mxu0 0
  %207 = vmatpush1.bf16.msra.mxu0 0
  %208 = vmatprep.subr.bf16.mxu0 0
  %209 = vmatpush1.bf16.msra.mxu0 0
  %210 = vmatprep.subr.bf16.mxu0 0
  %211 = vmatpush1.bf16.msra.mxu0 0
  %212 = vmatprep.subr.bf16.mxu0 0
  %213 = vmatpush1.bf16.msra.mxu0 0
  %214 = vmatprep.subr.bf16.mxu0 0
  %215 = vmatpush1.bf16.msra.mxu0 0
  %216 = vmatprep.mubr.bf16.mxu0 0
  %217 = vmatmul.mubr.bf16.gmra.mrb[0].mxu0 %v182
  %v218 = vpop.f32.mrb[0].mxu0
  %v219 = vadd.f32 %v172, %v218
  %v220 = vpop.f32.mrb[0].mxu0
  %v221 = vpop.f32.mrb[0].mxu0
  %v222 = vpop.f32.mrb[0].mxu0
  %223 = vdwg.mxu0
  %v224 = vxor.u32 %v219, 2147483648
  %v225 = vmul.f32 %v224, 1.442695
  %v226 = vpow.pop %v225
  %v227 = vadd.f32 %v226, 1.0
  %v228 = vrcp.pop %v227
  %v229 = vmul.f32 1.0, %v228
  %vm230 = vcmask 31744
  %231 = vst.msk [vmem:[%s7] sm:$0xff] %vm230, %v229
  // Predicated region
  $region30: #{tpu_custom_call.1} parent=0 // pred_check
    _
  $region31: #{tpu_custom_call.1} parent=0 // pred_check_branch
    %233 = sbr.rel (0) target = $region33
  $region32: #{tpu_custom_call.1} parent=0 // pred_region
    _
  $region33: #{tpu_custom_call.1} parent=0 // pred_fallthru
    _
  // Predicated region
  $region34: #{tpu_custom_call.1} parent=0 // pred_check
    _
  $region35: #{tpu_custom_call.1} parent=0 // pred_check_branch
    %235 = sbr.rel (0) target = $region37
  $region36: #{tpu_custom_call.1} parent=0 // pred_region
    _
  $region37: #{tpu_custom_call.1} parent=0 // pred_fallthru
    _

</llo_original>
